<compile_context>
chip_gen: v6e
topology: v6e:2x2x1
jax: 0.10.0
libtpu: 0.0.40
codegen_flags: <defaults>
</compile_context>

<pallas_src>
import jax
import jax.numpy as jnp
from jax.experimental import pallas as pl
from jax.experimental.pallas import tpu as pltpu


def _asym_qdq_kernel(enc_ref, x_ref, o_ref):
    # enc_ref: SMEM scalar-prefetch ref of shape (3,) = [scale, q_lo, q_hi]
    scale = enc_ref[0]
    q_lo = enc_ref[1]
    q_hi = enc_ref[2]
    x = x_ref[...].astype(jnp.float32)
    # Exact divide (not reciprocal-multiply) -> bit-exact round-half-to-even parity
    # with torch.round at quant-step boundaries.
    q = jnp.clip(jnp.round(x / scale), q_lo, q_hi)
    o_ref[...] = (q * scale).astype(o_ref.dtype)


def _pick_block_bytes_and_vmem_limit():
    """Dtype-agnostic block-byte target + explicit scoped-VMEM limit per chip class."""
    try:
        vmem_cap = int(pltpu.get_tpu_info().vmem_capacity_bytes)
    except Exception:
        vmem_cap = 128 << 20
    if vmem_cap <= (64 << 20):
        # v7x-class: 64 MiB VMEM, ~3.2 TB/s HBM/TC -> 8 MiB blocks (32 MiB double-
        # buffered in+out), explicit 48 MiB limit stays well under physical VMEM.
        return 8 << 20, 48 << 20
    # v5e/v6e-class (128 MiB VMEM): 4 MiB blocks = 16 MiB double-buffered footprint;
    # explicit 24 MiB limit so v5e's 16 MiB *default* scoped limit can't bite.
    return 4 << 20, 24 << 20


def range_learning_asym(x, emin, emax, bitwidth=8):
    """Pallas implementation of RangeLearningAsymAutograd.forward (elementwise fake-quant)."""
    n_steps = 2 ** bitwidth - 1
    orig_shape = x.shape
    total = int(x.size)
    if total == 0:
        return x

    # Scalar encoding math done once in the wrapper; kernel only sees [scale, lo, hi].
    emin_f = jnp.asarray(emin, jnp.float32)
    emax_f = jnp.asarray(emax, jnp.float32)
    n = jnp.float32(n_steps)
    scale = (emax_f - emin_f) / n
    off_r = jnp.round(emin_f / scale)          # STE.apply(offset) forward = round(offset)
    enc = jnp.stack([scale, off_r, off_r + n])  # clip bounds fold the -off_r / +off_r pair

    itemsize = jnp.dtype(x.dtype).itemsize
    block_bytes, vmem_limit = _pick_block_bytes_and_vmem_limit()

    # Pick a lane width (multiple of 128) that divides total -> free reshape, no pad.
    lanes = None
    for cand in (1024, 512, 256, 128):
        if total % cand == 0:
            lanes = cand
            break

    pad_tail = 0
    if lanes is None:
        if total * itemsize <= (256 << 10):
            # Small ragged input: one full-array block (1, total); the (8,128)
            # divisibility rule is waived when block shape == array shape.
            lanes = total
            rows = 1
        else:
            # Large ragged input (rare): single pad copy to a 1024-lane slab.
            lanes = 1024
            padded = pl.cdiv(total, lanes) * lanes
            pad_tail = padded - total
            rows = padded // lanes
    else:
        rows = total // lanes

    flat = x.reshape(-1)
    if pad_tail:
        flat = jnp.pad(flat, (0, pad_tail))
    x2 = flat.reshape(rows, lanes)

    # Block rows: target block_bytes per block, rounded to a multiple of 32 sublanes
    # (covers f32/bf16/int8 packing). Ragged final block is legal + masked.
    block_rows = max(32, (block_bytes // (lanes * itemsize)) // 32 * 32)
    if rows <= block_rows:
        block_rows = rows            # single block == full array dims
    grid = (pl.cdiv(rows, block_rows),)

    out2 = pl.pallas_call(
        _asym_qdq_kernel,
        out_shape=jax.ShapeDtypeStruct(x2.shape, x.dtype),
        grid_spec=pltpu.PrefetchScalarGridSpec(
            num_scalar_prefetch=1,            # enc -> SMEM, passed first to the kernel
            grid=grid,
            in_specs=[pl.BlockSpec((block_rows, lanes), lambda i, _enc: (i, 0))],
            out_specs=pl.BlockSpec((block_rows, lanes), lambda i, _enc: (i, 0)),
        ),
        compiler_params=pltpu.CompilerParams(
            dimension_semantics=("parallel",),   # shard blocks across TCs on v7x
            vmem_limit_bytes=vmem_limit,
        ),
    )(enc, x2)

    out_flat = out2.reshape(-1)
    if pad_tail:
        out_flat = out_flat[:total]
    return out_flat.reshape(orig_shape)


def _reference(x, emin, emax, bitwidth=8):
    n_steps = 2 ** bitwidth - 1
    scale = (emax - emin) / n_steps
    offset = emin / scale
    x_q = jnp.clip(jnp.round(x / scale) - jnp.round(offset), 0.0, n_steps)
    return (x_q + jnp.round(offset)) * scale


if __name__ == "__main__":
    key = jax.random.PRNGKey(0)
    emin = jnp.float32(-1.0)   # encoding min (learned range param in the module)
    emax = jnp.float32(1.5)    # encoding max

    # Primary test shape from the module (NCHW activations): 2048 elems -> 1024-lane slab.
    x = jax.random.normal(key, (2, 4, 16, 16), dtype=jnp.float32)
    y = range_learning_asym(x, emin, emax, bitwidth=8)
    jax.block_until_ready(y)
    y_ref = _reference(x, emin, emax, bitwidth=8)
    assert y.shape == x.shape
    assert jnp.allclose(y, y_ref, atol=1e-6, rtol=1e-6), "mismatch vs reference (primary)"

    # 1536 elems -> exercises the 512-lane divisor path (no padding copy).
    x1 = jax.random.normal(jax.random.PRNGKey(2), (2, 3, 8, 32), dtype=jnp.float32)
    y1 = range_learning_asym(x1, emin, emax, bitwidth=8)
    jax.block_until_ready(y1)
    assert jnp.allclose(y1, _reference(x1, emin, emax, bitwidth=8), atol=1e-6, rtol=1e-6), \
        "mismatch vs reference (512-lane path)"

    # Ragged small shape (1155 elems) -> single full-array block, no padding copy.
    x2 = jax.random.normal(jax.random.PRNGKey(1), (3, 5, 7, 11), dtype=jnp.float32)
    y2 = range_learning_asym(x2, emin, emax, bitwidth=8)
    jax.block_until_ready(y2)
    y2_ref = _reference(x2, emin, emax, bitwidth=8)
    assert y2.shape == x2.shape
    assert jnp.allclose(y2, y2_ref, atol=1e-6, rtol=1e-6), "mismatch vs reference (ragged)"

    print("KERNEL_OK")
</pallas_src>

<mosaic_0001>
module attributes {stable_mosaic.version = 11 : i64} {
  func.func @_asym_qdq_kernel(%arg0: i32, %arg1: memref<3xf32, #tpu.memory_space<smem>>, %arg2: memref<2x1024xf32, #tpu.memory_space<vmem>>, %arg3: memref<2x1024xf32, #tpu.memory_space<vmem>>) attributes {dimension_semantics = [#tpu.dimension_semantics<parallel>], iteration_bounds = array<i64: 1>, scalar_prefetch = 1 : i64, scratch_operands = 0 : i64, tpu.core_type = #tpu.core_type<tc>, window_params = [{transform_indices = @transform_0, window_bounds = array<i64: 2, 1024>}, {transform_indices = @transform_1, window_bounds = array<i64: 2, 1024>}]} {
    %c0 = arith.constant 0 : index
    %0 = memref.load %arg1[%c0] : memref<3xf32, #tpu.memory_space<smem>>
    %c1 = arith.constant 1 : index
    %1 = memref.load %arg1[%c1] : memref<3xf32, #tpu.memory_space<smem>>
    %c2 = arith.constant 2 : index
    %2 = memref.load %arg1[%c2] : memref<3xf32, #tpu.memory_space<smem>>
    %c0_0 = arith.constant 0 : index
    %c0_1 = arith.constant 0 : index
    %3 = vector.load %arg2[%c0_0, %c0_1] : memref<2x1024xf32, #tpu.memory_space<vmem>>, vector<2x1024xf32>
    %4 = vector.broadcast %0 : f32 to vector<2x1024xf32>
    %5 = arith.divf %3, %4 : vector<2x1024xf32>
    %6 = math.roundeven %5 : vector<2x1024xf32>
    %7 = vector.broadcast %1 : f32 to vector<2x1024xf32>
    %8 = arith.maximumf %7, %6 : vector<2x1024xf32>
    %9 = vector.broadcast %2 : f32 to vector<2x1024xf32>
    %10 = arith.minimumf %9, %8 : vector<2x1024xf32>
    %11 = vector.broadcast %0 : f32 to vector<2x1024xf32>
    %12 = arith.mulf %10, %11 : vector<2x1024xf32>
    %c0_2 = arith.constant 0 : index
    %c0_3 = arith.constant 0 : index
    %13 = vector.load %arg3[%c0_2, %c0_3] : memref<2x1024xf32, #tpu.memory_space<vmem>>, vector<2x1024xf32>
    tpu.vector_store %arg3[%c0_2, %c0_3], %12 {strides = array<i32>} : memref<2x1024xf32, #tpu.memory_space<vmem>>, vector<2x1024xf32>,
    return
  }
  func.func @transform_0(%arg0: i32, %arg1: memref<3xf32, #tpu.memory_space<smem>>) -> (i32, i32) {
    %c0_i32 = arith.constant 0 : i32
    %c0_i32_0 = arith.constant 0 : i32
    return %arg0, %c0_i32 : i32, i32
  }
  func.func @transform_1(%arg0: i32, %arg1: memref<3xf32, #tpu.memory_space<smem>>) -> (i32, i32) {
    %c0_i32 = arith.constant 0 : i32
    %c0_i32_0 = arith.constant 0 : i32
    return %arg0, %c0_i32 : i32, i32
  }
}

</mosaic_0001>

<llo_original>
// kernel: tpu_custom_call.1
$region0: #{tpu_custom_call.1}
  #allocation0 [shape = 'u32[]', space=smem, size = 0x4, offset = 0x4, fixed_abs, tag = 'smem constant byte address 0x4 - core index']
  #allocation1 [shape = 'u32[144,128]{1,0:T(1,128)}', space=vmem, size = 0x12000, scoped, tag = 'internal scratch']
  #allocation2 [shape = 's32[1]{0}', space=sflag, size = 0x4, scoped, tag = 'scoped memory for tpu_custom_call.1']
  #allocation3 [shape = 'u8[512]{0}', space=smem, size = 0x200, scoped, tag = 'prefetched SMEM operand 0']
  %s0 = inlined_call_operand.hbm [shape: f32[3], index: 0, kind: input, shape index: {}]
  %s1 = inlined_call_operand.hbm [shape: f32[2,1024], index: 1, kind: input, shape index: {}]
  %s2 = inlined_call_operand.hbm [shape: f32[2,1024], index: 2, kind: output, shape index: {}]
  %s3 = sld [smem:[#allocation0]]
  $region18: #{tpu_custom_call.1} parent=0
    _
  %s5 = ssub.s32 1, %s3
  %s6 = scalar_select 0, %s5, %s3
  %8 = dma.hbm_to_smem %s0, 16, [#allocation3], [#allocation2]
  %9 = dma.done [#allocation2], 16
  %10 = sfence
  $region1: #{tpu_custom_call.1} parent=0
    #allocation4 [shape = 'u8[8192]{0}', space=vmem, size = 0x2000, scoped, tag = 'input window, operand 1, single buffered']
    #allocation5 [shape = 's32[1]{0}', space=sflag, size = 0x4, scoped, tag = 'scoped memory for tpu_custom_call.1']
    #allocation6 [shape = 's32[1]{0}', space=sflag, size = 0x4, scoped, tag = 'scoped memory for tpu_custom_call.1']
    #allocation7 [shape = 'u8[8192]{0}', space=vmem, size = 0x2000, scoped, tag = 'output window, operand 0, single buffered']
    %11 = vsyncpa [#allocation5], 0
    %12 = vsyncpa [#allocation6], 0
    // Predicated region
    $region2: #{tpu_custom_call.1} parent=1 // pred_check
      _
    $region3: #{tpu_custom_call.1} parent=1 // pred_check_branch
      %14 = sbr.rel (0) target = $region5
    $region4: #{tpu_custom_call.1} parent=1 // pred_region
      %s16 = ssub.s32 256, 256
      %17 = vsyncadd [#allocation5], %s16
      %s19 = sshll.u32 [#allocation4], 4
      %s20 = int_to_ptr.vmem [resolvable:$true] %s19
      %22 = dma.hbm_to_vmem [thread:$0]  %s1, 256, %s20, [#allocation5]
    $region5: #{tpu_custom_call.1} parent=1 // pred_fallthru
      _
    // Predicated region
    $region6: #{tpu_custom_call.1} parent=1 // pred_check
      _
    $region7: #{tpu_custom_call.1} parent=1 // pred_check_branch
      %24 = sbr.rel (0) target = $region9
    $region8: #{tpu_custom_call.1} parent=1 // pred_region
      %25 = dma.done [#allocation5], 256
    $region9: #{tpu_custom_call.1} parent=1 // pred_fallthru
      _
    %s26 = sld [smem:[#allocation3]]
    %s27 = sld [smem:[#allocation3 + $0x1]]
    %s28 = sld [smem:[#allocation3 + $0x2]]
    %v29 = vld [vmem:[#allocation4] sm:$0xff]
    %v30 = vld [vmem:[#allocation4 + $0x8] sm:$0xff]
    %v31 = vstv %s26
    %v32 = vrcp.pop %v31
    %v33 = vmul.f32 %v29, %v32
    %v34 = vmul.f32 %v30, %v32
    %v35 = vround.ne.pseudo %v33
    %v36 = vround.ne.pseudo %v34
    %v37 = vstv %s27
    %v38 = vmax.f32 %v37, %v35
    %v39 = vmax.f32 %v37, %v36
    %v40 = vstv %s28
    %v41 = vmin.f32 %v40, %v38
    %v42 = vmin.f32 %v40, %v39
    %v43 = vmul.f32 %v41, %v31
    %v44 = vmul.f32 %v42, %v31
    %45 = vst [vmem:[#allocation7] sm:$0xff] %v43
    %46 = vst [vmem:[#allocation7 + $0x8] sm:$0xff] %v44
    // Predicated region
    $region10: #{tpu_custom_call.1} parent=1 // pred_check
      _
    $region11: #{tpu_custom_call.1} parent=1 // pred_check_branch
      %48 = sbr.rel (0) target = $region13
    $region12: #{tpu_custom_call.1} parent=1 // pred_region
      %s50 = ssub.s32 256, 256
      %51 = vsyncadd [#allocation6], %s50
      %s53 = sshll.u32 [#allocation7], 4
      %s54 = int_to_ptr.vmem [resolvable:$true] %s53
      %56 = dma.vmem_to_hbm [thread:$0]  %s54, 256, %s2, [#allocation6]
    $region13: #{tpu_custom_call.1} parent=1 // pred_fallthru
      _
    // Predicated region
    $region14: #{tpu_custom_call.1} parent=1 // pred_check
      _
    $region15: #{tpu_custom_call.1} parent=1 // pred_check_branch
      %58 = sbr.rel (0) target = $region17
    $region16: #{tpu_custom_call.1} parent=1 // pred_region
      %59 = dma.done [#allocation6], 256
    $region17: #{tpu_custom_call.1} parent=1 // pred_fallthru
      _
    %60 = vsyncpa [#allocation5], 1
    %61 = vsyncpa [#allocation6], 1

</llo_original>
